<compile_context>
chip_gen: v7x
topology: tpu7x:2x2x1
jax: 0.10.0
libtpu: 0.0.40
codegen_flags: <defaults>
</compile_context>

<pallas_src>
import jax
import jax.numpy as jnp
from jax.experimental import pallas as pl
from jax.experimental.pallas import tpu as pltpu


def _linear_kernel(x_ref, w_ref, b_ref, o_ref):
    x = x_ref[...]                 # (B, IN)   f32, VMEM
    w = w_ref[...]                 # (1, IN)   f32, VMEM (natural torch layout)
    b = b_ref[0]                   # scalar    f32, SMEM
    # OUT == 1: VPU elementwise mul + XLU lane reduce (skips the MXU round trip).
    acc = jnp.sum(x * w, axis=-1, keepdims=True)          # (B, 1) f32
    o_ref[...] = (acc + b).astype(o_ref.dtype)


@jax.jit
def linear_pallas(x, weight, bias):
    """x: (B, IN) f32; weight: (OUT, IN) f32 (PyTorch layout); bias: (OUT,) f32."""
    B, _IN = x.shape
    OUT = weight.shape[0]
    return pl.pallas_call(
        _linear_kernel,
        out_shape=jax.ShapeDtypeStruct((B, OUT), x.dtype),
        in_specs=[
            pl.BlockSpec(memory_space=pltpu.MemorySpace.VMEM),   # x, whole array
            pl.BlockSpec(memory_space=pltpu.MemorySpace.VMEM),   # weight, whole array
            pl.BlockSpec(memory_space=pltpu.MemorySpace.SMEM),   # bias, scalar in SMEM
        ],
        out_specs=pl.BlockSpec(memory_space=pltpu.MemorySpace.VMEM),
    )(x, weight, bias)


if __name__ == "__main__":
    key = jax.random.PRNGKey(0)
    k_x, k_w, k_b = jax.random.split(key, 3)

    # Shapes implied by the module: x = randn(5, 10), Linear(10, 1).
    B, IN, OUT = 5, 10, 1
    x = jax.random.normal(k_x, (B, IN), dtype=jnp.float32)

    # Deterministic parameter init (mimic torch.nn.Linear uniform bound 1/sqrt(IN)).
    bound = 1.0 / (IN ** 0.5)
    weight = jax.random.uniform(k_w, (OUT, IN), minval=-bound, maxval=bound,
                                dtype=jnp.float32)
    bias = jax.random.uniform(k_b, (OUT,), minval=-bound, maxval=bound,
                              dtype=jnp.float32)

    out = linear_pallas(x, weight, bias)
    jax.block_until_ready(out)

    # Sanity check against plain JAX reference.
    ref = x @ weight.T + bias
    assert out.shape == (B, OUT)
    assert jnp.allclose(out, ref, atol=1e-5, rtol=1e-5)

    print("KERNEL_OK")
</pallas_src>

<mosaic_0001>
module attributes {stable_mosaic.version = 11 : i64} {
  func.func @_linear_kernel(%arg0: memref<5x10xf32, #tpu.memory_space<vmem>>, %arg1: memref<1x10xf32, #tpu.memory_space<vmem>>, %arg2: memref<1xf32, #tpu.memory_space<smem>>, %arg3: memref<5x1xf32, #tpu.memory_space<vmem>>) attributes {dimension_semantics = [], scalar_prefetch = 0 : i64, scratch_operands = 0 : i64, tpu.core_type = #tpu.core_type<tc>} {
    %c0 = arith.constant 0 : index
    %c0_0 = arith.constant 0 : index
    %0 = vector.load %arg0[%c0, %c0_0] : memref<5x10xf32, #tpu.memory_space<vmem>>, vector<5x10xf32>
    %c0_1 = arith.constant 0 : index
    %c0_2 = arith.constant 0 : index
    %1 = vector.load %arg1[%c0_1, %c0_2] : memref<1x10xf32, #tpu.memory_space<vmem>>, vector<1x10xf32>
    %c0_3 = arith.constant 0 : index
    %2 = memref.load %arg2[%c0_3] : memref<1xf32, #tpu.memory_space<smem>>
    %3 = vector.broadcast %1 : vector<1x10xf32> to vector<5x10xf32>
    %4 = arith.mulf %0, %3 : vector<5x10xf32>
    %cst = arith.constant dense<0.000000e+00> : vector<5xf32>
    %5 = vector.multi_reduction <add>, %4, %cst [1] : vector<5x10xf32> to vector<5xf32>
    %6 = vector.shape_cast %5 : vector<5xf32> to vector<5x1xf32>
    %7 = vector.broadcast %2 : f32 to vector<5x1xf32>
    %8 = arith.addf %6, %7 : vector<5x1xf32>
    %c0_4 = arith.constant 0 : index
    %c0_5 = arith.constant 0 : index
    %9 = vector.load %arg3[%c0_4, %c0_5] : memref<5x1xf32, #tpu.memory_space<vmem>>, vector<5x1xf32>
    tpu.vector_store %arg3[%c0_4, %c0_5], %8 {strides = array<i32>} : memref<5x1xf32, #tpu.memory_space<vmem>>, vector<5x1xf32>,
    return
  }
}

</mosaic_0001>

<llo_original>
// kernel: linear_pallas.1
$region0: #{linear_pallas.1}
  #allocation0 [shape = 'u32[]', space=smem, size = 0x4, offset = 0x4, fixed_abs, tag = 'smem constant byte address 0x4 - core index']
  #allocation1 [shape = 'u32[144,128]{1,0:T(1,128)}', space=vmem, size = 0x12000, scoped, tag = 'internal scratch']
  #allocation2 [shape = 'f32[1]{0:T(128)S(6)}', space=smem, size = 0x200, scoped, tag = 'scoped memory for linear_pallas.1']
  %s0 = inlined_call_operand.hbm [shape: f32[5,10], index: 0, kind: input, shape index: {}]
  %s1 = inlined_call_operand.vmem [shape: f32[1,10], index: 1, kind: input, shape index: {}]
  %s2 = inlined_call_operand.<no memory space> [shape: f32[1], index: 2, kind: input, shape index: {}]
  %s3 = inlined_call_operand.vmem [shape: f32[5,1], index: 3, kind: output, shape index: {}]
  %s4 = sld [smem:[#allocation0]]
  $region26: #{linear_pallas.1} parent=0
    _
  %s6 = ssub.s32 1, %s4
  %s7 = scalar_select 0, %s6, %s4
  %8 = sst [smem:[#allocation2]] %s2
  $region1: #{linear_pallas.1} parent=0
    #allocation3 [shape = 'u8[4096]{0}', space=vmem, size = 0x1000, scoped, tag = 'input window, operand 0, single buffered']
    #allocation4 [shape = 's32[1]{0}', space=sflag, size = 0x4, scoped, tag = 'scoped memory for linear_pallas.1']
    %9 = vsyncpa [#allocation4], 0
    // Predicated region
    $region2: #{linear_pallas.1} parent=1 // pred_check
      _
    $region3: #{linear_pallas.1} parent=1 // pred_check_branch
      %11 = sbr.rel (0) target = $region5
    $region4: #{linear_pallas.1} parent=1 // pred_region
      %s13 = ssub.s32 128, 128
      %14 = vsyncadd [#allocation4], %s13
      %s16 = sshll.u32 [#allocation3], 4
      %s17 = int_to_ptr.vmem [resolvable:$true] %s16
      %19 = dma.hbm_to_vmem [thread:$0]  %s0, 128, %s17, [#allocation4]
    $region5: #{linear_pallas.1} parent=1 // pred_fallthru
      _
    // Predicated region
    $region6: #{linear_pallas.1} parent=1 // pred_check
      _
    $region7: #{linear_pallas.1} parent=1 // pred_check_branch
      %21 = sbr.rel (0) target = $region9
    $region8: #{linear_pallas.1} parent=1 // pred_region
      _
    $region9: #{linear_pallas.1} parent=1 // pred_fallthru
      _
    // Predicated region
    $region10: #{linear_pallas.1} parent=1 // pred_check
      _
    $region11: #{linear_pallas.1} parent=1 // pred_check_branch
      %23 = sbr.rel (0) target = $region13
    $region12: #{linear_pallas.1} parent=1 // pred_region
      _
    $region13: #{linear_pallas.1} parent=1 // pred_fallthru
      _
    // Predicated region
    $region14: #{linear_pallas.1} parent=1 // pred_check
      _
    $region15: #{linear_pallas.1} parent=1 // pred_check_branch
      %25 = sbr.rel (0) target = $region17
    $region16: #{linear_pallas.1} parent=1 // pred_region
      %26 = dma.done [#allocation4], 128
    $region17: #{linear_pallas.1} parent=1 // pred_fallthru
      _
    %v27 = vld [vmem:[#allocation3] sm:$0x1f]
    %v28 = vld [vmem:[%s1] sm:$0x1]
    %s29 = sld [smem:[#allocation2]]
    %v31 = vlaneseq
    %v32 = vshrl.u32 %v31, 7
    %v33 = vsub.s32 0, %v32
    %v34 = vrot.slane %v28, %v33
    %v36 = vmul.f32 %v27, %v34
    %vm37 = vcmask 77824
    %v38 = vsel %vm37, %v36, 0.0
    %39 = vadd.xlane.f32.xlu0 %v38
    %v40 = vpop.xlane.xlu0 %39
    %v41 = vstv %s29
    %v42 = vadd.f32 %v40, %v41
    %vm43 = vcmask 4096
    %44 = vst.msk [vmem:[%s3] sm:$0x1f] %vm43, %v42
    // Predicated region
    $region18: #{linear_pallas.1} parent=1 // pred_check
      _
    $region19: #{linear_pallas.1} parent=1 // pred_check_branch
      %46 = sbr.rel (0) target = $region21
    $region20: #{linear_pallas.1} parent=1 // pred_region
      _
    $region21: #{linear_pallas.1} parent=1 // pred_fallthru
      _
    // Predicated region
    $region22: #{linear_pallas.1} parent=1 // pred_check
      _
    $region23: #{linear_pallas.1} parent=1 // pred_check_branch
      %48 = sbr.rel (0) target = $region25
    $region24: #{linear_pallas.1} parent=1 // pred_region
      _
    $region25: #{linear_pallas.1} parent=1 // pred_fallthru
      _
    %49 = vsyncpa [#allocation4], 1

</llo_original>
